<compile_context>
chip_gen: v5e
topology: v5e:2x2
jax: 0.10.0
libtpu: 0.0.40
codegen_flags: <defaults>
</compile_context>

<pallas_src>
import jax
import jax.numpy as jnp
from jax import lax
from jax.experimental import pallas as pl
from jax.experimental.pallas import tpu as pltpu


# ---------------------------------------------------------------------------
# Kernels
# ---------------------------------------------------------------------------

def bn_stats_kernel(x_ref, sum_ref, sq_ref):
    """Partial per-channel sum / sum-of-squares for one batch tile.

    Output blocks (1, 1, C) are indexed by the batch-tile axis only, so they
    stay resident while the inner ("arbitrary") HW-tile axis accumulates.
    """
    @pl.when(pl.program_id(1) == 0)
    def _():
        sum_ref[...] = jnp.zeros_like(sum_ref)
        sq_ref[...] = jnp.zeros_like(sq_ref)

    x = x_ref[...].astype(jnp.float32)                  # (TB, C, THW) upcast on-chip
    s = jnp.sum(x, axis=2)                              # (TB, C)  lane (XLU) reduce
    sq = jnp.sum(x * x, axis=2)                         # (TB, C)
    sum_ref[...] += jnp.sum(s, axis=0, keepdims=True)[None]   # (1, 1, C)
    sq_ref[...] += jnp.sum(sq, axis=0, keepdims=True)[None]   # (1, 1, C)


def bn_norm_kernel(x_ref, scale_ref, shift_ref, o_ref):
    """y = x * scale + shift with per-channel broadcast (scale/shift are (1, C, 1) f32)."""
    x = x_ref[...].astype(jnp.float32)
    o_ref[...] = (x * scale_ref[...] + shift_ref[...]).astype(o_ref.dtype)


# ---------------------------------------------------------------------------
# Tiling helpers
# ---------------------------------------------------------------------------

def _divisors(n):
    return sorted({d for i in range(1, int(n ** 0.5) + 1) if n % i == 0
                   for d in (i, n // i)})


def _pick_tiles(B, C, HW, bytes_per_elem, budget=2 * 1024 * 1024, min_steps=4):
    """Pick (TB, THW) so each block is <= budget, tiles divide exactly (exact
    statistics, no padded rows), the lane tile is a multiple of 128 when
    possible, and the grid has enough steps to pipeline / megacore-shard."""
    if HW % 128 == 0:
        hw_divs = [d for d in _divisors(HW) if d % 128 == 0]
    else:
        # TODO(synk): HW not a multiple of 128 -> masked lane stores; a padded
        # NHWC (C-on-lanes) layout would avoid this if the caller can supply it.
        hw_divs = [HW]
    thw = hw_divs[0]
    for d in hw_divs:
        if C * d * bytes_per_elem <= budget:
            thw = max(thw, d)

    b_divs = _divisors(B)
    tb = 1
    for d in b_divs:
        if d * C * thw * bytes_per_elem <= budget:
            tb = max(tb, d)

    def steps(tb_, thw_):
        return (B // tb_) * (HW // thw_)

    # Extra grid steps cost ~0.35 us each; exposed DMA / an idle second core cost more.
    while steps(tb, thw) < min_steps:
        smaller_tb = [d for d in b_divs if d < tb]
        smaller_thw = [d for d in hw_divs if d < thw]
        if smaller_tb:
            tb = max(smaller_tb)
        elif smaller_thw:
            thw = max(smaller_thw)
        else:
            break
    return tb, thw


# ---------------------------------------------------------------------------
# Functional forward
# ---------------------------------------------------------------------------

def batchnorm2d_forward(x, weight, bias, running_mean, running_var,
                        num_batches_tracked, *, eps=1e-5, momentum=0.1,
                        training=True):
    """Functional BatchNorm2d forward.

    Returns (y, new_running_mean, new_running_var, new_num_batches_tracked).
    Normalization uses the biased variance (torch.var(..., unbiased=False));
    running_var is updated with the unbiased estimate, as nn.BatchNorm2d does.
    """
    B, C, H, W = x.shape
    HW = H * W
    x3 = x.reshape(B, C, HW)                             # free view; lanes = HW
    # Budget with 4 B/elem so f32 in-kernel upcast of a block always has headroom.
    TB, THW = _pick_tiles(B, C, HW, bytes_per_elem=4)
    nb, nhw = B // TB, HW // THW

    block_bytes = TB * C * THW * max(jnp.dtype(x.dtype).itemsize, 4)
    vmem_limit = int(min(max(6 * block_bytes + (4 << 20), 16 << 20), 48 << 20))

    if training:
        ssum, ssq = pl.pallas_call(
            bn_stats_kernel,
            out_shape=(jax.ShapeDtypeStruct((nb, 1, C), jnp.float32),
                       jax.ShapeDtypeStruct((nb, 1, C), jnp.float32)),
            grid_spec=pltpu.PrefetchScalarGridSpec(
                num_scalar_prefetch=0,
                grid=(nb, nhw),
                in_specs=[pl.BlockSpec((TB, C, THW), lambda i, j: (i, 0, j))],
                out_specs=(pl.BlockSpec((1, 1, C), lambda i, j: (i, 0, 0)),
                           pl.BlockSpec((1, 1, C), lambda i, j: (i, 0, 0)))),
            compiler_params=pltpu.CompilerParams(
                dimension_semantics=("parallel", "arbitrary"),
                vmem_limit_bytes=vmem_limit),
        )(x3)
        n = float(B * HW)
        mean = jnp.sum(ssum, axis=(0, 1)) / n                      # (C,)
        var = jnp.maximum(jnp.sum(ssq, axis=(0, 1)) / n - mean * mean, 0.0)
        var_unbiased = var * (n / (n - 1.0)) if n > 1 else var
        new_running_mean = (1.0 - momentum) * running_mean + momentum * mean
        new_running_var = (1.0 - momentum) * running_var + momentum * var_unbiased
        new_num_batches_tracked = num_batches_tracked + 1
    else:
        mean = running_mean.astype(jnp.float32)
        var = running_var.astype(jnp.float32)
        new_running_mean = running_mean
        new_running_var = running_var
        new_num_batches_tracked = num_batches_tracked

    # Fold (mean, var, eps, weight, bias) into per-channel scale/shift: O(C) glue.
    inv_std = lax.rsqrt(var + eps)
    scale = (weight.astype(jnp.float32) * inv_std).reshape(1, C, 1)
    shift = (bias.astype(jnp.float32) - mean * weight.astype(jnp.float32) * inv_std
             ).reshape(1, C, 1)

    y3 = pl.pallas_call(
        bn_norm_kernel,
        out_shape=jax.ShapeDtypeStruct((B, C, HW), x.dtype),       # native dtype out
        grid_spec=pltpu.PrefetchScalarGridSpec(
            num_scalar_prefetch=0,
            grid=(nb, nhw),
            in_specs=[pl.BlockSpec((TB, C, THW), lambda i, j: (i, 0, j)),
                      pl.BlockSpec((1, C, 1), lambda i, j: (0, 0, 0)),
                      pl.BlockSpec((1, C, 1), lambda i, j: (0, 0, 0))],
            out_specs=pl.BlockSpec((TB, C, THW), lambda i, j: (i, 0, j))),
        compiler_params=pltpu.CompilerParams(
            dimension_semantics=("parallel", "parallel"),
            vmem_limit_bytes=vmem_limit),
    )(x3, scale, shift)

    return (y3.reshape(B, C, H, W), new_running_mean, new_running_var,
            new_num_batches_tracked)


# ---------------------------------------------------------------------------
# Pure-JAX reference (identical semantics)
# ---------------------------------------------------------------------------

def reference_forward(x, weight, bias, running_mean, running_var,
                      num_batches_tracked, *, eps=1e-5, momentum=0.1,
                      training=True):
    xf = x.astype(jnp.float32)
    if training:
        n = float(x.shape[0] * x.shape[2] * x.shape[3])
        mean = jnp.mean(xf, axis=(0, 2, 3))
        var = jnp.var(xf, axis=(0, 2, 3))                          # biased (ddof=0)
        var_unbiased = var * (n / (n - 1.0)) if n > 1 else var
        new_rm = (1.0 - momentum) * running_mean + momentum * mean
        new_rv = (1.0 - momentum) * running_var + momentum * var_unbiased
        new_nbt = num_batches_tracked + 1
    else:
        mean, var = running_mean, running_var
        new_rm, new_rv, new_nbt = running_mean, running_var, num_batches_tracked
    m = mean.reshape(1, -1, 1, 1)
    v = var.reshape(1, -1, 1, 1)
    w = weight.reshape(1, -1, 1, 1)
    b = bias.reshape(1, -1, 1, 1)
    y = ((xf - m) / jnp.sqrt(v + eps) * w + b).astype(x.dtype)
    return y, new_rm, new_rv, new_nbt


if __name__ == "__main__":
    key = jax.random.PRNGKey(0)
    kx, kw, kb, km, kv = jax.random.split(key, 5)

    B, C, H, W = 2, 4, 16, 16
    x = jax.random.normal(kx, (B, C, H, W), jnp.float32)

    # Module default init is weight=1, bias=0; use non-trivial deterministic
    # values so the affine path is actually exercised.
    weight = 1.0 + 0.1 * jax.random.normal(kw, (C,), jnp.float32)
    bias = 0.1 * jax.random.normal(kb, (C,), jnp.float32)
    running_mean = jnp.zeros((C,), jnp.float32)
    running_var = jnp.ones((C,), jnp.float32)
    nbt = jnp.array(0, jnp.int32)

    # --- training-mode forward (batch statistics + running-stat update) ---
    y, rm, rv, nb_ = batchnorm2d_forward(x, weight, bias, running_mean,
                                         running_var, nbt, training=True)
    y = jax.block_until_ready(y)
    y_ref, rm_ref, rv_ref, nb_ref = reference_forward(
        x, weight, bias, running_mean, running_var, nbt, training=True)

    assert y.shape == (B, C, H, W) and y.dtype == x.dtype
    assert jnp.allclose(y, y_ref, atol=1e-4, rtol=1e-4), "train-mode output mismatch"
    assert jnp.allclose(rm, rm_ref, atol=1e-5, rtol=1e-5), "running_mean mismatch"
    assert jnp.allclose(rv, rv_ref, atol=1e-5, rtol=1e-5), "running_var mismatch"
    assert int(nb_) == int(nb_ref), "num_batches_tracked mismatch"

    # --- eval-mode forward (uses running statistics, no buffer update) ---
    rm_in = 0.05 * jax.random.normal(km, (C,), jnp.float32)
    rv_in = 1.0 + 0.1 * jax.random.uniform(kv, (C,), jnp.float32)
    y_ev, _, _, _ = batchnorm2d_forward(x, weight, bias, rm_in, rv_in, nbt,
                                        training=False)
    y_ev = jax.block_until_ready(y_ev)
    y_ev_ref, _, _, _ = reference_forward(x, weight, bias, rm_in, rv_in, nbt,
                                          training=False)
    assert jnp.allclose(y_ev, y_ev_ref, atol=1e-4, rtol=1e-4), "eval-mode output mismatch"

    # --- bf16 path: native-dtype wire traffic, f32 compute in-kernel ---
    xb = x.astype(jnp.bfloat16)
    y_b, _, _, _ = batchnorm2d_forward(xb, weight, bias, running_mean,
                                       running_var, nbt, training=True)
    y_b = jax.block_until_ready(y_b)
    y_b_ref, _, _, _ = reference_forward(xb, weight, bias, running_mean,
                                         running_var, nbt, training=True)
    assert y_b.dtype == jnp.bfloat16
    assert jnp.allclose(y_b.astype(jnp.float32), y_b_ref.astype(jnp.float32),
                        atol=3e-2, rtol=3e-2), "bf16 output mismatch"

    print("KERNEL_OK")
</pallas_src>

<mosaic_0001>
module attributes {stable_mosaic.version = 11 : i64} {
  func.func @bn_stats_kernel(%arg0: i32, %arg1: i32, %arg2: memref<1x4x128xf32, #tpu.memory_space<vmem>>, %arg3: memref<1x1x4xf32, #tpu.memory_space<vmem>>, %arg4: memref<1x1x4xf32, #tpu.memory_space<vmem>>) attributes {dimension_semantics = [#tpu.dimension_semantics<parallel>, #tpu.dimension_semantics<arbitrary>], iteration_bounds = array<i64: 2, 2>, scalar_prefetch = 0 : i64, scratch_operands = 0 : i64, tpu.core_type = #tpu.core_type<tc>, window_params = [{transform_indices = @transform_0, window_bounds = array<i64: 1, 4, 128>}, {transform_indices = @transform_1, window_bounds = array<i64: 1, 1, 4>}, {transform_indices = @transform_2, window_bounds = array<i64: 1, 1, 4>}]} {
    %c0_i32 = arith.constant 0 : i32
    %0 = arith.cmpi eq, %arg1, %c0_i32 : i32
    %1 = arith.extui %0 : i1 to i32
    %c0_i32_0 = arith.constant 0 : i32
    %2 = arith.cmpi ne, %1, %c0_i32_0 : i32
    scf.if %2 {
      %cst_18 = arith.constant 0.000000e+00 : f32
      %19 = vector.broadcast %cst_18 : f32 to vector<1x1x4xf32>
      %c0_19 = arith.constant 0 : index
      %c0_20 = arith.constant 0 : index
      %c0_21 = arith.constant 0 : index
      %20 = vector.load %arg3[%c0_19, %c0_20, %c0_21] : memref<1x1x4xf32, #tpu.memory_space<vmem>>, vector<1x1x4xf32>
      tpu.vector_store %arg3[%c0_19, %c0_20, %c0_21], %19 {strides = array<i32>} : memref<1x1x4xf32, #tpu.memory_space<vmem>>, vector<1x1x4xf32>,
      %cst_22 = arith.constant 0.000000e+00 : f32
      %21 = vector.broadcast %cst_22 : f32 to vector<1x1x4xf32>
      %c0_23 = arith.constant 0 : index
      %c0_24 = arith.constant 0 : index
      %c0_25 = arith.constant 0 : index
      %22 = vector.load %arg4[%c0_23, %c0_24, %c0_25] : memref<1x1x4xf32, #tpu.memory_space<vmem>>, vector<1x1x4xf32>
      tpu.vector_store %arg4[%c0_23, %c0_24, %c0_25], %21 {strides = array<i32>} : memref<1x1x4xf32, #tpu.memory_space<vmem>>, vector<1x1x4xf32>,
    } else {
    }
    %c0 = arith.constant 0 : index
    %c0_1 = arith.constant 0 : index
    %c0_2 = arith.constant 0 : index
    %3 = vector.load %arg2[%c0, %c0_1, %c0_2] : memref<1x4x128xf32, #tpu.memory_space<vmem>>, vector<1x4x128xf32>
    %cst = arith.constant dense<0.000000e+00> : vector<1x4xf32>
    %4 = vector.multi_reduction <add>, %3, %cst [2] : vector<1x4x128xf32> to vector<1x4xf32>
    %5 = arith.mulf %3, %3 : vector<1x4x128xf32>
    %cst_3 = arith.constant dense<0.000000e+00> : vector<1x4xf32>
    %6 = vector.multi_reduction <add>, %5, %cst_3 [2] : vector<1x4x128xf32> to vector<1x4xf32>
    %c0_4 = arith.constant 0 : index
    %c0_5 = arith.constant 0 : index
    %c0_6 = arith.constant 0 : index
    %7 = vector.load %arg3[%c0_4, %c0_5, %c0_6] : memref<1x1x4xf32, #tpu.memory_space<vmem>>, vector<1x1x4xf32>
    %cst_7 = arith.constant dense<0.000000e+00> : vector<4xf32>
    %8 = vector.multi_reduction <add>, %4, %cst_7 [0] : vector<1x4xf32> to vector<4xf32>
    %9 = vector.shape_cast %8 : vector<4xf32> to vector<1x4xf32>
    %10 = vector.shape_cast %9 : vector<1x4xf32> to vector<1x1x4xf32>
    %11 = arith.addf %7, %10 : vector<1x1x4xf32>
    %c0_8 = arith.constant 0 : index
    %c0_9 = arith.constant 0 : index
    %c0_10 = arith.constant 0 : index
    %12 = vector.load %arg3[%c0_8, %c0_9, %c0_10] : memref<1x1x4xf32, #tpu.memory_space<vmem>>, vector<1x1x4xf32>
    tpu.vector_store %arg3[%c0_8, %c0_9, %c0_10], %11 {strides = array<i32>} : memref<1x1x4xf32, #tpu.memory_space<vmem>>, vector<1x1x4xf32>,
    %c0_11 = arith.constant 0 : index
    %c0_12 = arith.constant 0 : index
    %c0_13 = arith.constant 0 : index
    %13 = vector.load %arg4[%c0_11, %c0_12, %c0_13] : memref<1x1x4xf32, #tpu.memory_space<vmem>>, vector<1x1x4xf32>
    %cst_14 = arith.constant dense<0.000000e+00> : vector<4xf32>
    %14 = vector.multi_reduction <add>, %6, %cst_14 [0] : vector<1x4xf32> to vector<4xf32>
    %15 = vector.shape_cast %14 : vector<4xf32> to vector<1x4xf32>
    %16 = vector.shape_cast %15 : vector<1x4xf32> to vector<1x1x4xf32>
    %17 = arith.addf %13, %16 : vector<1x1x4xf32>
    %c0_15 = arith.constant 0 : index
    %c0_16 = arith.constant 0 : index
    %c0_17 = arith.constant 0 : index
    %18 = vector.load %arg4[%c0_15, %c0_16, %c0_17] : memref<1x1x4xf32, #tpu.memory_space<vmem>>, vector<1x1x4xf32>
    tpu.vector_store %arg4[%c0_15, %c0_16, %c0_17], %17 {strides = array<i32>} : memref<1x1x4xf32, #tpu.memory_space<vmem>>, vector<1x1x4xf32>,
    return
  }
  func.func @transform_0(%arg0: i32, %arg1: i32) -> (i32, i32, i32) {
    %c0_i32 = arith.constant 0 : i32
    %c0_i32_0 = arith.constant 0 : i32
    return %arg0, %c0_i32, %arg1 : i32, i32, i32
  }
  func.func @transform_1(%arg0: i32, %arg1: i32) -> (i32, i32, i32) {
    %c0_i32 = arith.constant 0 : i32
    %c0_i32_0 = arith.constant 0 : i32
    %c0_i32_1 = arith.constant 0 : i32
    return %arg0, %c0_i32, %c0_i32_0 : i32, i32, i32
  }
  func.func @transform_2(%arg0: i32, %arg1: i32) -> (i32, i32, i32) {
    %c0_i32 = arith.constant 0 : i32
    %c0_i32_0 = arith.constant 0 : i32
    %c0_i32_1 = arith.constant 0 : i32
    return %arg0, %c0_i32, %c0_i32_0 : i32, i32, i32
  }
}

</mosaic_0001>

<llo_original>
// kernel: tpu_custom_call.1
$region0: #{tpu_custom_call.1}
  #allocation0 [shape = 'u32[]', space=smem, size = 0x4, offset = 0x4, fixed_abs, tag = 'smem constant byte address 0x4 - core index']
  #allocation1 [shape = 'u32[72,128]{1,0:T(1,128)}', space=vmem, size = 0x9000, scoped, tag = 'internal scratch']
  %s0 = inlined_call_operand.hbm [shape: f32[2,4,256], index: 0, kind: input, shape index: {}]
  %s1 = inlined_call_operand.hbm [shape: f32[2,1,4], index: 1, kind: output, shape index: {0}]
  %s2 = inlined_call_operand.hbm [shape: f32[2,1,4], index: 2, kind: output, shape index: {1}]
  %3 = xla_tuple %s1, %s2
  %s4 = sld [smem:[#allocation0]]
  $region53: #{tpu_custom_call.1} parent=0
    _
  %s6 = ssub.s32 1, %s4
  %s7 = scalar_select 0, %s6, %s4
  $region1: #{tpu_custom_call.1} parent=0
    #allocation2 [shape = 'u8[4096]{0}', space=vmem, size = 0x1000, scoped, tag = 'input window, operand 0']
    #allocation3 [shape = 's32[2]{0}', space=sflag, size = 0x8, scoped, tag = 'scoped memory for tpu_custom_call.1']
    #allocation4 [shape = 's32[2]{0}', space=sflag, size = 0x8, scoped, tag = 'scoped memory for tpu_custom_call.1']
    #allocation5 [shape = 'u8[1024]{0}', space=vmem, size = 0x400, scoped, tag = 'output window, operand 0']
    #allocation6 [shape = 'u8[1024]{0}', space=vmem, size = 0x400, scoped, tag = 'output window, operand 1']
    #allocation7 [shape = 's32[2]{0}', space=sflag, size = 0x8, scoped, tag = 'scoped memory for tpu_custom_call.1']
    %8 = vsyncpa [#allocation3], 0
    %s9 = scalar_lea.sflag [#allocation3], 1
    %10 = vsyncpa %s9, 0
    %11 = vsyncpa [#allocation4], 0
    %s12 = scalar_lea.sflag [#allocation4], 1
    %13 = vsyncpa %s12, 0
    %14 = vsyncpa [#allocation7], 0
    %s15 = scalar_lea.sflag [#allocation7], 1
    %16 = vsyncpa %s15, 0
    loop: start=0, step=1, limit=6
    $region2: #{tpu_custom_call.1} parent=1 // loop_pre_header
      _
    $region3: #{tpu_custom_call.1} parent=1 // loop_header
      %s18 = sphi 0, %s22
      %p19 = scmp.ge.s32.totalorder %s18, 6
      %s25 = sphi 0, %s37
      %s26 = sphi 0, %s33
      %s27 = sphi 0, %s25
      %s28 = sphi 0, %s26
      %s29 = sphi 0, %s27
      %s30 = sphi 0, %s28
      %s42 = sphi 0, %s44
      %s45 = sphi 0, %s42
      %s46 = sphi 0, %s45
      %s62 = sphi 0, %s46
      %s68 = sphi 0, %s70
      %s71 = sphi 0, %s68
      %s72 = sphi 0, %s71
      %s88 = sphi 0, %s72
      %s94 = sphi 0, %s96
      %s97 = sphi 0, %s94
      %s98 = sphi 0, %s97
      %s114 = sphi 0, %s98
    $region4: #{tpu_custom_call.1} parent=1 // loop_header_branch
      %21 = sbr.rel (%p19) target = $region8
    $region5: #{tpu_custom_call.1} parent=1 // loop_body
      %s23 = ssub.s32 %s18, 1
      %s24 = ssub.s32 %s18, 2
      %s31 = sadd.s32 1, %s26
      %p32 = scmp.ge.s32.totalorder %s31, 2
      %s33 = scalar_select %p32, 0, %s31
      %s34 = sadd.s32 1, %s25
      %s35 = scalar_select %p32, %s34, %s25
      %p36 = scmp.ge.s32.totalorder %s35, 2
      %s37 = scalar_select %p36, 0, %s35
      %s38 = ssub.s32 %s25, %s37
      %s39 = ssub.s32 %s26, %s33
      %s40 = sor.u32 %s38, %s39
      %p41 = scmp.eq.s32.totalorder %s40, 0
      %s43 = sadd.s32 %s42, 1
      %s44 = scalar_select %p41, %s42, %s43
      %p47 = pneg %p41
      %p48 = scmp.eq.s32.totalorder %s18, 3
      %p49 = por %p47, %p48
      %p50 = scmp.ne.s32.totalorder %s42, %s45
      %p51 = scmp.eq.s32.totalorder %s18, 0
      %p52 = por %p50, %p51
      %p53 = scmp.ne.s32.totalorder %s42, %s45
      %p54 = scmp.eq.s32.totalorder %s23, 3
      %p55 = por %p53, %p54
      %p56 = scmp.ne.s32.totalorder %s45, %s46
      %p57 = scmp.eq.s32.totalorder %s23, 0
      %p58 = por %p56, %p57
      %p59 = scmp.ne.s32.totalorder %s45, %s46
      %p60 = scmp.eq.s32.totalorder %s24, 3
      %p61 = por %p59, %p60
      %p63 = scmp.ne.s32.totalorder %s46, %s62
      %p64 = scmp.eq.s32.totalorder %s24, 0
      %p65 = por %p63, %p64
      %s66 = ssub.s32 %s25, %s37
      %p67 = scmp.eq.s32.totalorder %s66, 0
      %s69 = sadd.s32 %s68, 1
      %s70 = scalar_select %p67, %s68, %s69
      %p73 = pneg %p67
      %p74 = scmp.eq.s32.totalorder %s18, 3
      %p75 = por %p73, %p74
      %p76 = scmp.ne.s32.totalorder %s68, %s71
      %p77 = scmp.eq.s32.totalorder %s18, 0
      %p78 = por %p76, %p77
      %p79 = scmp.ne.s32.totalorder %s68, %s71
      %p80 = scmp.eq.s32.totalorder %s23, 3
      %p81 = por %p79, %p80
      %p82 = scmp.ne.s32.totalorder %s71, %s72
      %p83 = scmp.eq.s32.totalorder %s23, 0
      %p84 = por %p82, %p83
      %p85 = scmp.ne.s32.totalorder %s71, %s72
      %p86 = scmp.eq.s32.totalorder %s24, 3
      %p87 = por %p85, %p86
      %p89 = scmp.ne.s32.totalorder %s72, %s88
      %p90 = scmp.eq.s32.totalorder %s24, 0
      %p91 = por %p89, %p90
      %s92 = ssub.s32 %s25, %s37
      %p93 = scmp.eq.s32.totalorder %s92, 0
      %s95 = sadd.s32 %s94, 1
      %s96 = scalar_select %p93, %s94, %s95
      %p99 = pneg %p93
      %p100 = scmp.eq.s32.totalorder %s18, 3
      %p101 = por %p99, %p100
      %p102 = scmp.ne.s32.totalorder %s94, %s97
      %p103 = scmp.eq.s32.totalorder %s18, 0
      %p104 = por %p102, %p103
      %p105 = scmp.ne.s32.totalorder %s94, %s97
      %p106 = scmp.eq.s32.totalorder %s23, 3
      %p107 = por %p105, %p106
      %p108 = scmp.ne.s32.totalorder %s97, %s98
      %p109 = scmp.eq.s32.totalorder %s23, 0
      %p110 = por %p108, %p109
      %p111 = scmp.ne.s32.totalorder %s97, %s98
      %p112 = scmp.eq.s32.totalorder %s24, 3
      %p113 = por %p111, %p112
      %p115 = scmp.ne.s32.totalorder %s98, %s114
      %p116 = scmp.eq.s32.totalorder %s24, 0
      %p117 = por %p115, %p116
      %p118 = scmp.le.s32.totalorder 1, %s18
      %p119 = scmp.lt.s32.totalorder %s18, 5
      %p120 = pnand %p118, %p119
      %p121 = pneg %p120
      // Predicated region
      $region9: #{tpu_custom_call.1} parent=5 // pred_check
        _
      $region10: #{tpu_custom_call.1} parent=5 // pred_check_branch
        %123 = sbr.rel (%p120) target = $region12
      $region11: #{tpu_custom_call.1} parent=5 // pred_region
        %s124 = ssub.s32 %s18, 1
      $region12: #{tpu_custom_call.1} parent=5 // pred_fallthru
        _
      %p125 = scmp.lt.s32.totalorder %s18, 4
      // Predicated region
      $region13: #{tpu_custom_call.1} parent=5 // pred_check
        %p126 = pneg %p125
      $region14: #{tpu_custom_call.1} parent=5 // pred_check_branch
        %128 = sbr.rel (%p126) target = $region16
      $region15: #{tpu_custom_call.1} parent=5 // pred_region
        // Predicated region
        $region17: #{tpu_custom_call.1} parent=15 // pred_check
          %p129 = pneg %p52
        $region18: #{tpu_custom_call.1} parent=15 // pred_check_branch
          %131 = sbr.rel (%p129) target = $region20
        $region19: #{tpu_custom_call.1} parent=15 // pred_region
          %s132 = sand.u32 %s42, 1
          %s133 = scalar_lea.sflag [#allocation3], %s132
          %s134 = sand.u32 %s42, 1
          %s135 = smul.addr %s134, 4
          %s136 = scalar_lea.vmem [#allocation2], %s135
          %138 = vsyncadd %s133, 0
          %s139 = smul.addr %s25, 2
          %s140 = sadd.s32 %s26, %s139
          %s141 = smul.addr %s140, 4
          %s142 = scalar_lea.hbm %s0, %s141
          %s144 = sshll.u32 %s142, 4
          %s145 = int_to_ptr.hbm [resolvable:$true] %s144
          %s146 = sshll.u32 %s136, 4
          %s147 = int_to_ptr.vmem [resolvable:$true] %s146
          %149 = dma.hbm_to_vmem [thread:$0]  %s145, 64, %s147, %s133
        $region20: #{tpu_custom_call.1} parent=15 // pred_fallthru
          _
      $region16: #{tpu_custom_call.1} parent=5 // pred_fallthru
        _
      %p150 = scmp.le.s32.totalorder 1, %s18
      %p151 = scmp.lt.s32.totalorder %s18, 5
      %p152 = pnand %p150, %p151
      %p153 = pneg %p152
      // Predicated region
      $region21: #{tpu_custom_call.1} parent=5 // pred_check
        _
      $region22: #{tpu_custom_call.1} parent=5 // pred_check_branch
        %155 = sbr.rel (%p152) target = $region24
      $region23: #{tpu_custom_call.1} parent=5 // pred_region
        %s156 = ssub.s32 %s18, 1
        %s157 = sand.u32 %s45, 1
        %s158 = scalar_lea.sflag [#allocation3], %s157
        %s159 = sand.u32 %s45, 1
        %s160 = smul.addr %s159, 4
        %s161 = scalar_lea.vmem [#allocation2], %s160
        // Predicated region
        $region25: #{tpu_custom_call.1} parent=23 // pred_check
          %p162 = pneg %p58
        $region26: #{tpu_custom_call.1} parent=23 // pred_check_branch
          %164 = sbr.rel (%p162) target = $region28
        $region27: #{tpu_custom_call.1} parent=23 // pred_region
          %166 = dma.done %s158, 64
        $region28: #{tpu_custom_call.1} parent=23 // pred_fallthru
          _
        %s167 = sand.u32 %s45, 1
        %s168 = scalar_lea.sflag [#allocation3], %s167
        %s169 = sand.u32 %s45, 1
        %s170 = smul.addr %s169, 4
        %s171 = scalar_lea.vmem [#allocation2], %s170
        %p172 = pneg %p58
        %p173 = pneg %p55
        %p174 = pneg %p84
        %p175 = pneg %p81
        %s176 = sand.u32 %s71, 1
        %s177 = scalar_lea.sflag [#allocation4], %s176
        %s178 = sand.u32 %s71, 1
        %s179 = scalar_lea.vmem [#allocation5], %s178
        %p180 = pneg %p110
        %p181 = pneg %p107
        %s182 = sand.u32 %s97, 1
        %s183 = scalar_lea.sflag [#allocation7], %s182
        %s184 = sand.u32 %s97, 1
        %s185 = scalar_lea.vmem [#allocation6], %s184
        %p186 = scmp.eq.s32.totalorder %s28, 0
        // Predicated region
        $region29: #{tpu_custom_call.1} parent=23 // pred_check
          %p187 = pneg %p186
        $region30: #{tpu_custom_call.1} parent=23 // pred_check_branch
          %189 = sbr.rel (%p187) target = $region32
        $region31: #{tpu_custom_call.1} parent=23 // pred_region
          %vm190 = vcmask 24576
          %191 = vst.msk [vmem:[%s179] sm:$0x1] %vm190, 0.0
          %192 = vst.msk [vmem:[%s185] sm:$0x1] %vm190, 0.0
        $region32: #{tpu_custom_call.1} parent=23 // pred_fallthru
          _
        %v193 = vld [vmem:[%s161] sm:$0xf]
        %vm194 = vcmask 1043456
        %v195 = vsel %vm194, %v193, 0.0
        %196 = vadd.xlane.f32.xlu0 %v195
        %v197 = vpop.xlane.xlu0 %196
        %v198 = vmul.f32 %v193, %v193
        %v199 = vsel %vm194, %v198, 0.0
        %200 = vadd.xlane.f32.xlu0 %v199
        %v201 = vpop.xlane.xlu0 %200
        %v202 = vld [vmem:[%s179] sm:$0x1]
        %v203 = vadd.f32 %v197, 0.0
        %v205 = vperm.slane %v203, 0
        %v206 = vperm.slane %v203, 1
        %v207 = vperm.slane %v203, 2
        %v208 = vperm.slane %v203, 3
        %209 = vst [vmem:[#allocation1] ss:$9 sm:$0xff] %v205
        %s210 = scalar_lea.vmem [#allocation1], 1
        %211 = vst [vmem:[%s210] ss:$9 sm:$0xff] %v206
        %s212 = scalar_lea.vmem [#allocation1], 2
        %213 = vst [vmem:[%s212] ss:$9 sm:$0xff] %v207
        %s214 = scalar_lea.vmem [#allocation1], 3
        %215 = vst [vmem:[%s214] ss:$9 sm:$0xff] %v208
        %v216 = vld [vmem:[#allocation1] sm:$0xff]
        %217 = vset.pattern.permute.xlu0 0
        %218 = vperm.xlu0 %217, %v216
        %v219 = vpop.permute.xlu0 %218
        %v220 = vlaneseq
        %v221 = vand.u32 %v220, 127
        %v222 = vperm.slane %v219, %v221
        %v224 = vadd.f32 %v202, %v222
        %vm225 = vcmask 24576
        %226 = vst.msk [vmem:[%s179] sm:$0x1] %vm225, %v224
        %v227 = vld [vmem:[%s185] sm:$0x1]
        %v228 = vadd.f32 %v201, 0.0
        %v230 = vperm.slane %v228, 0
        %v231 = vperm.slane %v228, 1
        %v232 = vperm.slane %v228, 2
        %v233 = vperm.slane %v228, 3
        %234 = vst [vmem:[#allocation1] ss:$9 sm:$0xff] %v230
        %s235 = scalar_lea.vmem [#allocation1], 1
        %236 = vst [vmem:[%s235] ss:$9 sm:$0xff] %v231
        %s237 = scalar_lea.vmem [#allocation1], 2
        %238 = vst [vmem:[%s237] ss:$9 sm:$0xff] %v232
        %s239 = scalar_lea.vmem [#allocation1], 3
        %240 = vst [vmem:[%s239] ss:$9 sm:$0xff] %v233
        %v241 = vld [vmem:[#allocation1] sm:$0xff]
        %242 = vset.pattern.permute.xlu0 0
        %243 = vperm.xlu0 %242, %v241
        %v244 = vpop.permute.xlu0 %243
        %v245 = vperm.slane %v244, %v221
        %v247 = vadd.f32 %v227, %v245
        %248 = vst.msk [vmem:[%s185] sm:$0x1] %vm225, %v247
        %s249 = sand.u32 %s71, 1
        %s250 = scalar_lea.sflag [#allocation4], %s249
        %s251 = sand.u32 %s71, 1
        %s252 = scalar_lea.vmem [#allocation5], %s251
        %s253 = sand.u32 %s97, 1
        %s254 = scalar_lea.sflag [#allocation7], %s253
        %s255 = sand.u32 %s97, 1
        %s256 = scalar_lea.vmem [#allocation6], %s255
        // Predicated region
        $region33: #{tpu_custom_call.1} parent=23 // pred_check
          %p257 = pneg %p81
        $region34: #{tpu_custom_call.1} parent=23 // pred_check_branch
          %259 = sbr.rel (%p257) target = $region36
        $region35: #{tpu_custom_call.1} parent=23 // pred_region
          %261 = vsyncadd %s250, 0
          %s262 = scalar_lea.hbm %s1, %s27
          %s264 = sshll.u32 %s252, 4
          %s265 = int_to_ptr.vmem [resolvable:$true] %s264
          %s266 = sshll.u32 %s262, 4
          %s267 = int_to_ptr.hbm [resolvable:$true] %s266
          %269 = dma.vmem_to_hbm [thread:$0]  %s265, 16, %s267, %s250
        $region36: #{tpu_custom_call.1} parent=23 // pred_fallthru
          _
        // Predicated region
        $region37: #{tpu_custom_call.1} parent=23 // pred_check
          %p270 = pneg %p107
        $region38: #{tpu_custom_call.1} parent=23 // pred_check_branch
          %272 = sbr.rel (%p270) target = $region40
        $region39: #{tpu_custom_call.1} parent=23 // pred_region
          %274 = vsyncadd %s254, 0
          %s275 = scalar_lea.hbm %s2, %s27
          %s277 = sshll.u32 %s256, 4
          %s278 = int_to_ptr.vmem [resolvable:$true] %s277
          %s279 = sshll.u32 %s275, 4
          %s280 = int_to_ptr.hbm [resolvable:$true] %s279
          %282 = dma.vmem_to_hbm [thread:$0]  %s278, 16, %s280, %s254
        $region40: #{tpu_custom_call.1} parent=23 // pred_fallthru
          _
      $region24: #{tpu_custom_call.1} parent=5 // pred_fallthru
        _
      %p283 = scmp.le.s32.totalorder 2, %s18
      // Predicated region
      $region41: #{tpu_custom_call.1} parent=5 // pred_check
        %p284 = pneg %p283
      $region42: #{tpu_custom_call.1} parent=5 // pred_check_branch
        %286 = sbr.rel (%p284) target = $region44
      $region43: #{tpu_custom_call.1} parent=5 // pred_region
        %s287 = ssub.s32 %s18, 2
        // Predicated region
        $region45: #{tpu_custom_call.1} parent=43 // pred_check
          %p288 = pneg %p87
        $region46: #{tpu_custom_call.1} parent=43 // pred_check_branch
          %290 = sbr.rel (%p288) target = $region48
        $region47: #{tpu_custom_call.1} parent=43 // pred_region
          %s291 = sand.u32 %s72, 1
          %s292 = scalar_lea.sflag [#allocation4], %s291
          %s293 = sand.u32 %s72, 1
          %s294 = scalar_lea.vmem [#allocation5], %s293
          %296 = dma.done %s292, 16
        $region48: #{tpu_custom_call.1} parent=43 // pred_fallthru
          _
        // Predicated region
        $region49: #{tpu_custom_call.1} parent=43 // pred_check
          %p297 = pneg %p113
        $region50: #{tpu_custom_call.1} parent=43 // pred_check_branch
          %299 = sbr.rel (%p297) target = $region52
        $region51: #{tpu_custom_call.1} parent=43 // pred_region
          %s300 = sand.u32 %s98, 1
          %s301 = scalar_lea.sflag [#allocation7], %s300
          %s302 = sand.u32 %s98, 1
          %s303 = scalar_lea.vmem [#allocation6], %s302
          %305 = dma.done %s301, 16
        $region52: #{tpu_custom_call.1} parent=43 // pred_fallthru
          _
      $region44: #{tpu_custom_call.1} parent=5 // pred_fallthru
        _
    $region6: #{tpu_custom_call.1} parent=1 // loop_footer
      %s22 = sadd.s32 1, %s18
    $region7: #{tpu_custom_call.1} parent=1 // loop_footer_branch
      %17 = sbr.rel target = $region3
    $region8: #{tpu_custom_call.1} parent=1 // loop_exit
      _
    %306 = vsyncpa [#allocation3], 1
    %s307 = scalar_lea.sflag [#allocation3], 1
    %308 = vsyncpa %s307, 1
    %309 = vsyncpa [#allocation4], 1
    %s310 = scalar_lea.sflag [#allocation4], 1
    %311 = vsyncpa %s310, 1
    %312 = vsyncpa [#allocation7], 1
    %s313 = scalar_lea.sflag [#allocation7], 1
    %314 = vsyncpa %s313, 1

</llo_original>
